<compile_context>
chip_gen: v6e
topology: v6e:2x2x1
jax: 0.10.0
libtpu: 0.0.40
codegen_flags: <defaults>
</compile_context>

<pallas_src>
import math
import functools

import jax
import jax.numpy as jnp
from jax.experimental import pallas as pl
from jax.experimental.pallas import tpu as pltpu

_LANE = 128
_SUBLANE = 8
_MAX_TILE_B = 512  # rows of x per grid step (>=512 reaches ~85% HBM roofline)


def _round_up(x, m):
    return ((x + m - 1) // m) * m


# ----------------------------------------------------------------------------
# Kernel
# ----------------------------------------------------------------------------
def _make_mlp_kernel(num_layers: int, activation: str):
    """Fused MLP kernel for `num_layers` Linear layers.

    Kernel ref signature:
        x_ref, w0, b0, w1, b1, ..., w_{L-1}, b_{L-1}, out_ref
    Last layer uses sigmoid (output_activation); earlier layers use
    `activation`, matching Q_Net.forward.
    """
    if activation == "relu":
        act = lambda h: jnp.maximum(h, 0.0)
    elif activation == "tanh":
        act = jnp.tanh
    elif activation == "sigmoid":
        act = jax.nn.sigmoid
    else:
        raise ValueError(f"Activation function {activation} not supported.")

    def kernel(*refs):
        x_ref = refs[0]
        o_ref = refs[-1]
        param_refs = refs[1:-1]
        assert len(param_refs) == 2 * num_layers

        h = x_ref[...]                              # (TILE_B, state) f32
        for i in range(num_layers):
            w = param_refs[2 * i][...]              # (in, out), bf16 resident
            b = param_refs[2 * i + 1][...]          # (1, out), f32 resident
            # MXU matmul in the weights' dtype, f32 accumulate.
            h = jnp.dot(h.astype(w.dtype), w,
                        preferred_element_type=jnp.float32)
            h = h + b.astype(jnp.float32)
            if i < num_layers - 1:
                h = act(h)                          # hidden activation (f32)
            else:
                h = jax.nn.sigmoid(h)               # output_activation
        o_ref[...] = h.astype(o_ref.dtype)          # lane-dense store

    return kernel


# ----------------------------------------------------------------------------
# Wrapper
# ----------------------------------------------------------------------------
@functools.partial(jax.jit, static_argnames=("activation",))
def q_net_forward(x, params, activation="relu"):
    """params: list of (W, b); W: (in, out) (bf16 or f32), b: (1, out) f32."""
    num_layers = len(params)
    batch, state_size = x.shape
    action_size = int(params[-1][0].shape[1])

    # --- lane-dense output head: pad final out-features to a multiple of 128.
    out_pad = _round_up(action_size, _LANE)
    w_last, b_last = params[-1]
    if out_pad != action_size:
        w_last = jnp.pad(w_last, ((0, 0), (0, out_pad - action_size)))
        b_last = jnp.pad(b_last, ((0, 0), (0, out_pad - action_size)))
    padded_params = list(params[:-1]) + [(w_last, b_last)]

    # --- 1-D grid over the batch dimension.
    tile_b = min(_MAX_TILE_B, _round_up(batch, _SUBLANE))
    b_pad = _round_up(batch, tile_b)
    if b_pad != batch:
        x = jnp.pad(x, ((0, b_pad - batch), (0, 0)))
    grid = (b_pad // tile_b,)

    flat = []
    for w, b in padded_params:
        flat.extend([w, b])

    # x / out tiles stream; weights & biases are resident (constant index_map).
    in_specs = [pl.BlockSpec((tile_b, state_size), lambda i: (i, 0))]
    for arr in flat:
        in_specs.append(pl.BlockSpec(arr.shape, lambda i: (0, 0)))
    out_specs = pl.BlockSpec((tile_b, out_pad), lambda i: (i, 0))

    # --- cost hint for XLA's scheduler.
    flops = 2 * b_pad * sum(int(w.shape[0]) * int(w.shape[1])
                            for w, _ in padded_params)
    transcendentals = b_pad * out_pad  # sigmoid head
    if activation in ("tanh", "sigmoid"):
        transcendentals += b_pad * sum(int(w.shape[1])
                                       for w, _ in padded_params[:-1])
    bytes_accessed = (x.size * x.dtype.itemsize
                      + sum(a.size * a.dtype.itemsize for a in flat)
                      + b_pad * out_pad * 4)

    kernel = _make_mlp_kernel(num_layers, activation)

    out = pl.pallas_call(
        kernel,
        out_shape=jax.ShapeDtypeStruct((b_pad, out_pad), jnp.float32),
        grid=grid,
        in_specs=in_specs,
        out_specs=out_specs,
        compiler_params=pltpu.CompilerParams(
            dimension_semantics=("parallel",)),
        cost_estimate=pl.CostEstimate(
            flops=flops,
            transcendentals=transcendentals,
            bytes_accessed=bytes_accessed),
    )(x, *flat)

    return out[:batch, :action_size]


# ----------------------------------------------------------------------------
# Deterministic parameter init (mirrors weights_init_: kaiming_normal_ with
# nonlinearity='relu' (gain=sqrt(2), fan_in mode) for weights, zero biases).
# Weights are stored transposed (in, out) and cast to `param_dtype` (bf16 by
# default to halve weight DMA and use the MXU's native bf16 path).
# ----------------------------------------------------------------------------
def init_q_net_params(key, state_size, action_size, layer_sizes,
                      param_dtype=jnp.bfloat16):
    dims = [state_size] + list(layer_sizes) + [action_size]
    params = []
    for i in range(len(dims) - 1):
        fan_in, fan_out = dims[i], dims[i + 1]
        key, sub = jax.random.split(key)
        std = math.sqrt(2.0 / fan_in)  # kaiming_normal_, nonlinearity='relu'
        w = std * jax.random.normal(sub, (fan_in, fan_out), dtype=jnp.float32)
        b = jnp.zeros((1, fan_out), dtype=jnp.float32)
        params.append((w.astype(param_dtype), b))
    return params


# Pure-JAX reference (mirrors the kernel's mixed-precision math).
def q_net_reference(x, params, activation="relu"):
    act = {"relu": lambda h: jnp.maximum(h, 0.0),
           "tanh": jnp.tanh,
           "sigmoid": jax.nn.sigmoid}[activation]
    h = x.astype(jnp.float32)
    for i, (w, b) in enumerate(params):
        h = jnp.dot(h.astype(w.dtype), w, preferred_element_type=jnp.float32)
        h = h + b.astype(jnp.float32)
        h = act(h) if i < len(params) - 1 else jax.nn.sigmoid(h)
    return h


# ----------------------------------------------------------------------------
if __name__ == "__main__":
    state_size = 8
    action_size = 4
    layer_sizes = [32, 32]
    activation = "relu"

    key = jax.random.PRNGKey(0)
    key, k_params = jax.random.split(key)
    params = init_q_net_params(k_params, state_size, action_size, layer_sizes)

    # Small-shape check (batch=2; batch is padded up to the 8-row sublane tile
    # inside the wrapper and the padding is sliced off).
    key, k_x = jax.random.split(key)
    x_small = jax.random.normal(k_x, (2, state_size), dtype=jnp.float32)
    out_small = jax.block_until_ready(
        q_net_forward(x_small, params, activation=activation))
    ref_small = q_net_reference(x_small, params, activation=activation)
    assert out_small.shape == (2, action_size)
    assert jnp.allclose(out_small, ref_small, atol=1e-4, rtol=1e-4), \
        "small-batch mismatch vs reference"

    # Larger batch exercises the multi-step batch grid + remainder padding.
    key, k_x2 = jax.random.split(key)
    x_big = jax.random.normal(k_x2, (1000, state_size), dtype=jnp.float32)
    out_big = jax.block_until_ready(
        q_net_forward(x_big, params, activation=activation))
    ref_big = q_net_reference(x_big, params, activation=activation)
    assert out_big.shape == (1000, action_size)
    assert jnp.allclose(out_big, ref_big, atol=1e-4, rtol=1e-4), \
        "large-batch mismatch vs reference"

    print("KERNEL_OK")
</pallas_src>

<mosaic_0001>
module attributes {stable_mosaic.version = 11 : i64} {
  func.func @kernel(%arg0: i32, %arg1: memref<8x8xf32, #tpu.memory_space<vmem>>, %arg2: memref<8x32xbf16, #tpu.memory_space<vmem>>, %arg3: memref<1x32xf32, #tpu.memory_space<vmem>>, %arg4: memref<32x32xbf16, #tpu.memory_space<vmem>>, %arg5: memref<1x32xf32, #tpu.memory_space<vmem>>, %arg6: memref<32x128xbf16, #tpu.memory_space<vmem>>, %arg7: memref<1x128xf32, #tpu.memory_space<vmem>>, %arg8: memref<8x128xf32, #tpu.memory_space<vmem>>) attributes {dimension_semantics = [#tpu.dimension_semantics<parallel>], iteration_bounds = array<i64: 1>, scalar_prefetch = 0 : i64, scratch_operands = 0 : i64, tpu.core_type = #tpu.core_type<tc>, window_params = [{transform_indices = @transform_0, window_bounds = array<i64: 8, 8>}, {pipeline_mode = #tpu.pipeline_mode<synchronous>, transform_indices = @transform_1, window_bounds = array<i64: 8, 32>}, {pipeline_mode = #tpu.pipeline_mode<synchronous>, transform_indices = @transform_2, window_bounds = array<i64: 1, 32>}, {pipeline_mode = #tpu.pipeline_mode<synchronous>, transform_indices = @transform_3, window_bounds = array<i64: 32, 32>}, {pipeline_mode = #tpu.pipeline_mode<synchronous>, transform_indices = @transform_4, window_bounds = array<i64: 1, 32>}, {pipeline_mode = #tpu.pipeline_mode<synchronous>, transform_indices = @transform_5, window_bounds = array<i64: 32, 128>}, {pipeline_mode = #tpu.pipeline_mode<synchronous>, transform_indices = @transform_6, window_bounds = array<i64: 1, 128>}, {transform_indices = @transform_7, window_bounds = array<i64: 8, 128>}]} {
    %c0 = arith.constant 0 : index
    %c0_0 = arith.constant 0 : index
    %0 = vector.load %arg1[%c0, %c0_0] : memref<8x8xf32, #tpu.memory_space<vmem>>, vector<8x8xf32>
    %c0_1 = arith.constant 0 : index
    %c0_2 = arith.constant 0 : index
    %1 = vector.load %arg2[%c0_1, %c0_2] : memref<8x32xbf16, #tpu.memory_space<vmem>>, vector<8x32xbf16>
    %c0_3 = arith.constant 0 : index
    %c0_4 = arith.constant 0 : index
    %2 = vector.load %arg3[%c0_3, %c0_4] : memref<1x32xf32, #tpu.memory_space<vmem>>, vector<1x32xf32>
    %3 = arith.truncf %0 : vector<8x8xf32> to vector<8x8xbf16>
    %cst = arith.constant dense<0.000000e+00> : vector<8x32xf32>
    %4 = tpu.matmul %3, %1, %cst {dimension_numbers = #tpu.dot_dimension_numbers<[1], [0], [0], [1], [0, 0, 1, 1], [], []>} : vector<8x8xbf16>, vector<8x32xbf16>, vector<8x32xf32> -> vector<8x32xf32>
    %5 = vector.broadcast %2 : vector<1x32xf32> to vector<8x32xf32>
    %6 = arith.addf %4, %5 : vector<8x32xf32>
    %cst_5 = arith.constant 0.000000e+00 : f32
    %7 = vector.broadcast %cst_5 : f32 to vector<8x32xf32>
    %8 = arith.maximumf %6, %7 : vector<8x32xf32>
    %c0_6 = arith.constant 0 : index
    %c0_7 = arith.constant 0 : index
    %9 = vector.load %arg4[%c0_6, %c0_7] : memref<32x32xbf16, #tpu.memory_space<vmem>>, vector<32x32xbf16>
    %c0_8 = arith.constant 0 : index
    %c0_9 = arith.constant 0 : index
    %10 = vector.load %arg5[%c0_8, %c0_9] : memref<1x32xf32, #tpu.memory_space<vmem>>, vector<1x32xf32>
    %11 = arith.truncf %8 : vector<8x32xf32> to vector<8x32xbf16>
    %cst_10 = arith.constant dense<0.000000e+00> : vector<8x32xf32>
    %12 = tpu.matmul %11, %9, %cst_10 {dimension_numbers = #tpu.dot_dimension_numbers<[1], [0], [0], [1], [0, 0, 1, 1], [], []>} : vector<8x32xbf16>, vector<32x32xbf16>, vector<8x32xf32> -> vector<8x32xf32>
    %13 = vector.broadcast %10 : vector<1x32xf32> to vector<8x32xf32>
    %14 = arith.addf %12, %13 : vector<8x32xf32>
    %cst_11 = arith.constant 0.000000e+00 : f32
    %15 = vector.broadcast %cst_11 : f32 to vector<8x32xf32>
    %16 = arith.maximumf %14, %15 : vector<8x32xf32>
    %c0_12 = arith.constant 0 : index
    %c0_13 = arith.constant 0 : index
    %17 = vector.load %arg6[%c0_12, %c0_13] : memref<32x128xbf16, #tpu.memory_space<vmem>>, vector<32x128xbf16>
    %c0_14 = arith.constant 0 : index
    %c0_15 = arith.constant 0 : index
    %18 = vector.load %arg7[%c0_14, %c0_15] : memref<1x128xf32, #tpu.memory_space<vmem>>, vector<1x128xf32>
    %19 = arith.truncf %16 : vector<8x32xf32> to vector<8x32xbf16>
    %cst_16 = arith.constant dense<0.000000e+00> : vector<8x128xf32>
    %20 = tpu.matmul %19, %17, %cst_16 {dimension_numbers = #tpu.dot_dimension_numbers<[1], [0], [0], [1], [0, 0, 1, 1], [], []>} : vector<8x32xbf16>, vector<32x128xbf16>, vector<8x128xf32> -> vector<8x128xf32>
    %21 = vector.broadcast %18 : vector<1x128xf32> to vector<8x128xf32>
    %22 = arith.addf %20, %21 : vector<8x128xf32>
    %23 = arith.negf %22 : vector<8x128xf32>
    %24 = math.exp %23 : vector<8x128xf32>
    %cst_17 = arith.constant 1.000000e+00 : f32
    %25 = vector.broadcast %cst_17 : f32 to vector<8x128xf32>
    %26 = arith.addf %25, %24 : vector<8x128xf32>
    %27 = arith.divf %25, %26 : vector<8x128xf32>
    %c0_18 = arith.constant 0 : index
    %c0_19 = arith.constant 0 : index
    %28 = vector.load %arg8[%c0_18, %c0_19] : memref<8x128xf32, #tpu.memory_space<vmem>>, vector<8x128xf32>
    tpu.vector_store %arg8[%c0_18, %c0_19], %27 {strides = array<i32>} : memref<8x128xf32, #tpu.memory_space<vmem>>, vector<8x128xf32>,
    return
  }
  func.func @transform_0(%arg0: i32) -> (i32, i32) {
    %c0_i32 = arith.constant 0 : i32
    %c0_i32_0 = arith.constant 0 : i32
    return %arg0, %c0_i32 : i32, i32
  }
  func.func @transform_1(%arg0: i32) -> (i32, i32) {
    %c0_i32 = arith.constant 0 : i32
    %c0_i32_0 = arith.constant 0 : i32
    %c0_i32_1 = arith.constant 0 : i32
    return %c0_i32, %c0_i32_0 : i32, i32
  }
  func.func @transform_2(%arg0: i32) -> (i32, i32) {
    %c0_i32 = arith.constant 0 : i32
    %c0_i32_0 = arith.constant 0 : i32
    %c0_i32_1 = arith.constant 0 : i32
    return %c0_i32, %c0_i32_0 : i32, i32
  }
  func.func @transform_3(%arg0: i32) -> (i32, i32) {
    %c0_i32 = arith.constant 0 : i32
    %c0_i32_0 = arith.constant 0 : i32
    %c0_i32_1 = arith.constant 0 : i32
    return %c0_i32, %c0_i32_0 : i32, i32
  }
  func.func @transform_4(%arg0: i32) -> (i32, i32) {
    %c0_i32 = arith.constant 0 : i32
    %c0_i32_0 = arith.constant 0 : i32
    %c0_i32_1 = arith.constant 0 : i32
    return %c0_i32, %c0_i32_0 : i32, i32
  }
  func.func @transform_5(%arg0: i32) -> (i32, i32) {
    %c0_i32 = arith.constant 0 : i32
    %c0_i32_0 = arith.constant 0 : i32
    %c0_i32_1 = arith.constant 0 : i32
    return %c0_i32, %c0_i32_0 : i32, i32
  }
  func.func @transform_6(%arg0: i32) -> (i32, i32) {
    %c0_i32 = arith.constant 0 : i32
    %c0_i32_0 = arith.constant 0 : i32
    %c0_i32_1 = arith.constant 0 : i32
    return %c0_i32, %c0_i32_0 : i32, i32
  }
  func.func @transform_7(%arg0: i32) -> (i32, i32) {
    %c0_i32 = arith.constant 0 : i32
    %c0_i32_0 = arith.constant 0 : i32
    return %arg0, %c0_i32 : i32, i32
  }
}

</mosaic_0001>

<llo_original>
// kernel: q_net_forward.1
$region0: #{q_net_forward.1}
  #allocation0 [shape = 'u32[]', space=smem, size = 0x4, offset = 0x4, fixed_abs, tag = 'smem constant byte address 0x4 - core index']
  #allocation1 [shape = 'u32[144,128]{1,0:T(1,128)}', space=vmem, size = 0x12000, scoped, tag = 'internal scratch']
  %s0 = inlined_call_operand.vmem [shape: f32[8,8], index: 0, kind: input, shape index: {}]
  %s1 = inlined_call_operand.vmem [shape: bf16[8,32], index: 1, kind: input, shape index: {}]
  %s2 = inlined_call_operand.vmem [shape: f32[1,32], index: 2, kind: input, shape index: {}]
  %s3 = inlined_call_operand.vmem [shape: bf16[32,32], index: 3, kind: input, shape index: {}]
  %s4 = inlined_call_operand.vmem [shape: f32[1,32], index: 4, kind: input, shape index: {}]
  %s5 = inlined_call_operand.vmem [shape: bf16[32,128], index: 5, kind: input, shape index: {}]
  %s6 = inlined_call_operand.vmem [shape: f32[1,128], index: 6, kind: input, shape index: {}]
  %s7 = inlined_call_operand.vmem [shape: f32[8,128], index: 7, kind: output, shape index: {}]
  %s8 = sld [smem:[#allocation0]]
  $region38: #{q_net_forward.1} parent=0
    _
  %s10 = ssub.s32 1, %s8
  %s11 = scalar_select 0, %s10, %s8
  // Predicated region
  $region2: #{q_net_forward.1} parent=0 // pred_check
    _
  $region3: #{q_net_forward.1} parent=0 // pred_check_branch
    %13 = sbr.rel (0) target = $region5
  $region4: #{q_net_forward.1} parent=0 // pred_region
    _
  $region5: #{q_net_forward.1} parent=0 // pred_fallthru
    _
  // Predicated region
  $region6: #{q_net_forward.1} parent=0 // pred_check
    _
  $region7: #{q_net_forward.1} parent=0 // pred_check_branch
    %15 = sbr.rel (0) target = $region9
  $region8: #{q_net_forward.1} parent=0 // pred_region
    _
  $region9: #{q_net_forward.1} parent=0 // pred_fallthru
    _
  // Predicated region
  $region10: #{q_net_forward.1} parent=0 // pred_check
    _
  $region11: #{q_net_forward.1} parent=0 // pred_check_branch
    %17 = sbr.rel (0) target = $region13
  $region12: #{q_net_forward.1} parent=0 // pred_region
    _
  $region13: #{q_net_forward.1} parent=0 // pred_fallthru
    _
  // Predicated region
  $region14: #{q_net_forward.1} parent=0 // pred_check
    _
  $region15: #{q_net_forward.1} parent=0 // pred_check_branch
    %19 = sbr.rel (0) target = $region17
  $region16: #{q_net_forward.1} parent=0 // pred_region
    _
  $region17: #{q_net_forward.1} parent=0 // pred_fallthru
    _
  // Predicated region
  $region18: #{q_net_forward.1} parent=0 // pred_check
    _
  $region19: #{q_net_forward.1} parent=0 // pred_check_branch
    %21 = sbr.rel (0) target = $region21
  $region20: #{q_net_forward.1} parent=0 // pred_region
    _
  $region21: #{q_net_forward.1} parent=0 // pred_fallthru
    _
  // Predicated region
  $region22: #{q_net_forward.1} parent=0 // pred_check
    _
  $region23: #{q_net_forward.1} parent=0 // pred_check_branch
    %23 = sbr.rel (0) target = $region25
  $region24: #{q_net_forward.1} parent=0 // pred_region
    _
  $region25: #{q_net_forward.1} parent=0 // pred_fallthru
    _
  // Predicated region
  $region26: #{q_net_forward.1} parent=0 // pred_check
    _
  $region27: #{q_net_forward.1} parent=0 // pred_check_branch
    %25 = sbr.rel (0) target = $region29
  $region28: #{q_net_forward.1} parent=0 // pred_region
    _
  $region29: #{q_net_forward.1} parent=0 // pred_fallthru
    _
  %v27 = vld [vmem:[%s0] sm:$0xff]
  %v28 = vld [vmem:[%s1] sm:$0xf]
  %v29 = vld [vmem:[%s2] sm:$0x1]
  %v30 = vpack.c.bf16 %v27, %v27
  %v32 = vlaneseq
  %v33 = vshrl.u32 %v32, 7
  %v34 = vsub.s32 0, %v33
  %v35 = vrot.slane %v29, %v34
  %vm37 = vcmask 64512
  %v39 = vsel %vm37, %v30, 0
  %vm41 = vcmask 1043456
  %v43 = vsel %vm41, %v28, 0
  %45 = vmatprep.subr.bf16.mxu0 0
  %46 = vmatpush1.bf16.msra.mxu0 0
  %47 = vmatprep.subr.bf16.mxu0 0
  %48 = vmatpush1.bf16.msra.mxu0 0
  %49 = vmatprep.subr.bf16.mxu0 0
  %50 = vmatpush1.bf16.msra.mxu0 0
  %51 = vmatprep.subr.bf16.mxu0 0
  %52 = vmatpush1.bf16.msra.mxu0 0
  %53 = vmatprep.subr.bf16.mxu0 0
  %54 = vmatpush1.bf16.msra.mxu0 0
  %55 = vmatprep.subr.bf16.mxu0 0
  %56 = vmatpush1.bf16.msra.mxu0 0
  %57 = vmatprep.subr.bf16.mxu0 0
  %58 = vmatpush1.bf16.msra.mxu0 0
  %59 = vmatprep.subr.bf16.mxu0 0
  %60 = vmatpush1.bf16.msra.mxu0 %v43
  %61 = vmatprep.subr.bf16.mxu0 0
  %62 = vmatpush2.bf16.msra.mxu0 0
  %63 = vmatprep.subr.bf16.mxu0 0
  %64 = vmatpush2.bf16.msra.mxu0 0
  %65 = vmatprep.subr.bf16.mxu0 0
  %66 = vmatpush2.bf16.msra.mxu0 0
  %67 = vmatprep.subr.bf16.mxu0 0
  %68 = vmatpush2.bf16.msra.mxu0 0
  %69 = vmatprep.subr.bf16.mxu0 0
  %70 = vmatpush2.bf16.msra.mxu0 0
  %71 = vmatprep.subr.bf16.mxu0 0
  %72 = vmatpush2.bf16.msra.mxu0 0
  %73 = vmatprep.subr.bf16.mxu0 0
  %74 = vmatpush2.bf16.msra.mxu0 0
  %75 = vmatprep.subr.bf16.mxu0 0
  %76 = vmatpush2.bf16.msra.mxu0 0
  %77 = vmatprep.mubr.bf16.mxu0 0
  %78 = vmatmul.mubr.bf16.gmra.mxu0 %v39
  %v79 = vpop.f32.mrf.mxu0
  %v80 = vadd.f32 %v35, %v79
  %v81 = vpop.f32.mrf.mxu0
  %v82 = vpop.f32.mrf.mxu0
  %v83 = vpop.f32.mrf.mxu0
  %84 = vdwg.mxu0
  %v85 = vmax.f32 %v80, 0.0
  %v86 = vld [vmem:[%s3] sm:$0xf]
  %v87 = vld [vmem:[%s3 + $0x4] sm:$0xf]
  %v88 = vld [vmem:[%s3 + $0x8] sm:$0xf]
  %v89 = vld [vmem:[%s3 + $0xc] sm:$0xf]
  %v90 = vld [vmem:[%s4] sm:$0x1]
  %v91 = vpack.c.bf16 %v85, %v85
  %v93 = vlaneseq
  %v94 = vshrl.u32 %v93, 7
  %v95 = vsub.s32 0, %v94
  %v96 = vrot.slane %v90, %v95
  %v102 = vunpack.c.l.b16 %v86
  %v103 = vunpack.c.l.b16 %v87
  %v104 = vunpack.c.l.b16 %v88
  %v105 = vunpack.c.l.b16 %v89
  %v106 = vpack.c.b16 %v103, %v102
  %v107 = vpack.c.b16 %v105, %v104
  %vm110 = vcmask 261120
  %v112 = vsel %vm110, %v91, 0
  %114 = vmatprep.subr.bf16.mxu0 0
  %115 = vmatpush1.bf16.msra.mxu0 0
  %116 = vmatprep.subr.bf16.mxu0 0
  %117 = vmatpush1.bf16.msra.mxu0 0
  %118 = vmatprep.subr.bf16.mxu0 0
  %119 = vmatpush1.bf16.msra.mxu0 0
  %120 = vmatprep.subr.bf16.mxu0 0
  %121 = vmatpush1.bf16.msra.mxu0 0
  %122 = vmatprep.subr.bf16.mxu0 0
  %123 = vmatpush1.bf16.msra.mxu0 0
  %124 = vmatprep.subr.bf16.mxu0 0
  %125 = vmatpush1.bf16.msra.mxu0 0
  %126 = vmatprep.subr.bf16.mxu0 0
  %127 = vmatpush1.bf16.msra.mxu0 %v107
  %128 = vmatprep.subr.bf16.mxu0 0
  %129 = vmatpush1.bf16.msra.mxu0 %v106
  %130 = vmatprep.subr.bf16.mxu0 0
  %131 = vmatpush2.bf16.msra.mxu0 0
  %132 = vmatprep.subr.bf16.mxu0 0
  %133 = vmatpush2.bf16.msra.mxu0 0
  %134 = vmatprep.subr.bf16.mxu0 0
  %135 = vmatpush2.bf16.msra.mxu0 0
  %136 = vmatprep.subr.bf16.mxu0 0
  %137 = vmatpush2.bf16.msra.mxu0 0
  %138 = vmatprep.subr.bf16.mxu0 0
  %139 = vmatpush2.bf16.msra.mxu0 0
  %140 = vmatprep.subr.bf16.mxu0 0
  %141 = vmatpush2.bf16.msra.mxu0 0
  %142 = vmatprep.subr.bf16.mxu0 0
  %143 = vmatpush2.bf16.msra.mxu0 0
  %144 = vmatprep.subr.bf16.mxu0 0
  %145 = vmatpush2.bf16.msra.mxu0 0
  %146 = vmatprep.mubr.bf16.mxu0 0
  %147 = vmatmul.mubr.bf16.gmra.mxu0 %v112
  %v148 = vpop.f32.mrf.mxu0
  %v149 = vadd.f32 %v96, %v148
  %v150 = vpop.f32.mrf.mxu0
  %v151 = vpop.f32.mrf.mxu0
  %v152 = vpop.f32.mrf.mxu0
  %153 = vdwg.mxu0
  %v154 = vmax.f32 %v149, 0.0
  %v155 = vld [vmem:[%s5] sm:$0xf]
  %v156 = vld [vmem:[%s5 + $0x4] sm:$0xf]
  %v157 = vld [vmem:[%s5 + $0x8] sm:$0xf]
  %v158 = vld [vmem:[%s5 + $0xc] sm:$0xf]
  %v159 = vld [vmem:[%s6] sm:$0x1]
  %v160 = vpack.c.bf16 %v154, %v154
  %v162 = vlaneseq
  %v163 = vshrl.u32 %v162, 7
  %v164 = vsub.s32 0, %v163
  %v165 = vrot.slane %v159, %v164
  %v171 = vunpack.c.l.b16 %v155
  %v172 = vunpack.c.l.b16 %v156
  %v173 = vunpack.c.l.b16 %v157
  %v174 = vunpack.c.l.b16 %v158
  %v175 = vpack.c.b16 %v172, %v171
  %v176 = vpack.c.b16 %v174, %v173
  %v180 = vsel %vm110, %v160, 0
  %182 = vmatprep.subr.bf16.mxu0 0
  %183 = vmatpush1.bf16.msra.mxu0 0
  %184 = vmatprep.subr.bf16.mxu0 0
  %185 = vmatpush1.bf16.msra.mxu0 0
  %186 = vmatprep.subr.bf16.mxu0 0
  %187 = vmatpush1.bf16.msra.mxu0 0
  %188 = vmatprep.subr.bf16.mxu0 0
  %189 = vmatpush1.bf16.msra.mxu0 0
  %190 = vmatprep.subr.bf16.mxu0 0
  %191 = vmatpush1.bf16.msra.mxu0 0
  %192 = vmatprep.subr.bf16.mxu0 0
  %193 = vmatpush1.bf16.msra.mxu0 0
  %194 = vmatprep.subr.bf16.mxu0 0
  %195 = vmatpush1.bf16.msra.mxu0 %v176
  %196 = vmatprep.subr.bf16.mxu0 0
  %197 = vmatpush1.bf16.msra.mxu0 %v175
  %198 = vmatprep.subr.bf16.mxu0 0
  %199 = vmatpush2.bf16.msra.mxu0 0
  %200 = vmatprep.subr.bf16.mxu0 0
  %201 = vmatpush2.bf16.msra.mxu0 0
  %202 = vmatprep.subr.bf16.mxu0 0
  %203 = vmatpush2.bf16.msra.mxu0 0
  %204 = vmatprep.subr.bf16.mxu0 0
  %205 = vmatpush2.bf16.msra.mxu0 0
  %206 = vmatprep.subr.bf16.mxu0 0
  %207 = vmatpush2.bf16.msra.mxu0 0
  %208 = vmatprep.subr.bf16.mxu0 0
  %209 = vmatpush2.bf16.msra.mxu0 0
  %210 = vmatprep.subr.bf16.mxu0 0
  %211 = vmatpush2.bf16.msra.mxu0 0
  %212 = vmatprep.subr.bf16.mxu0 0
  %213 = vmatpush2.bf16.msra.mxu0 0
  %214 = vmatprep.mubr.bf16.mxu0 0
  %215 = vmatmul.mubr.bf16.gmra.mxu0 %v180
  %v216 = vpop.f32.mrf.mxu0
  %v217 = vadd.f32 %v165, %v216
  %v218 = vpop.f32.mrf.mxu0
  %v219 = vpop.f32.mrf.mxu0
  %v220 = vpop.f32.mrf.mxu0
  %221 = vdwg.mxu0
  %v222 = vxor.u32 %v217, 2147483648
  %v223 = vmul.f32 %v222, 1.442695
  %v224 = vpow.pop %v223
  %v225 = vadd.f32 %v224, 1.0
  %v226 = vrcp.pop %v225
  %v227 = vmul.f32 1.0, %v226
  %228 = vst [vmem:[%s7] sm:$0xff] %v227
  // Predicated region
  $region30: #{q_net_forward.1} parent=0 // pred_check
    _
  $region31: #{q_net_forward.1} parent=0 // pred_check_branch
    %230 = sbr.rel (0) target = $region33
  $region32: #{q_net_forward.1} parent=0 // pred_region
    _
  $region33: #{q_net_forward.1} parent=0 // pred_fallthru
    _
  // Predicated region
  $region34: #{q_net_forward.1} parent=0 // pred_check
    _
  $region35: #{q_net_forward.1} parent=0 // pred_check_branch
    %232 = sbr.rel (0) target = $region37
  $region36: #{q_net_forward.1} parent=0 // pred_region
    _
  $region37: #{q_net_forward.1} parent=0 // pred_fallthru
    _

</llo_original>
